<compile_context>
chip_gen: v6e
topology: v6e:2x2x1
jax: 0.10.0
libtpu: 0.0.40
codegen_flags: <defaults>
</compile_context>

<pallas_src>
import functools

import jax
import jax.numpy as jnp
from jax.experimental import pallas as pl
from jax.experimental.pallas import tpu as pltpu


def _leaky_relu_kernel(x_ref, o_ref, *, alpha, use_max):
    x = x_ref[...]
    a = jnp.asarray(alpha, dtype=x.dtype)
    if use_max:
        # max(alpha*x, x) == LeakyReLU(x) for 0 < alpha <= 1 (single vmax).
        o_ref[...] = jnp.maximum(x, a * x)
    else:
        o_ref[...] = jnp.where(x > 0, x, a * x)


def _vmem_capacity_bytes() -> int:
    """Best-effort VMEM capacity query (falls back to the v7x floor)."""
    try:
        return int(pltpu.get_tpu_info().vmem_capacity_bytes)
    except Exception:
        return 64 * 1024 * 1024  # conservative: v7x has the smallest VMEM


def leaky_relu(x: jax.Array, alpha: float = 0.01, *, donate: bool = False) -> jax.Array:
    """Elementwise LeakyReLU via Pallas (floating dtypes)."""
    if not jnp.issubdtype(x.dtype, jnp.floating):
        raise TypeError("leaky_relu Pallas kernel requires a floating dtype, "
                        f"got {x.dtype}")

    orig_shape = x.shape
    dtype = x.dtype
    n = x.size
    if n == 0:
        return x

    LANE = 128
    itemsize = jnp.dtype(dtype).itemsize
    # Packed-sublane alignment: 8 for f32, 16 for bf16/f16, 32 for 8-bit dtypes.
    sub = max(8, 32 // itemsize)

    # ---- Ragged (non-lane-aligned) sizes: single fused XLA pass. ------------
    # A pad + kernel + slice round trip is 3 full HBM passes; XLA's fused
    # elementwise is 1 pass, so Pallas can't win here.
    if n % LANE != 0:
        return jnp.where(x > 0, x, alpha * x)

    # ---- Flatten to a lane-dense (R, C) slab with a wide last dim. ----------
    x_flat = x.reshape(-1)
    rows0 = n // LANE  # number of 128-lane rows

    w = 1
    for cand in (64, 32, 16, 8, 4, 2):
        if rows0 % cand == 0 and (rows0 // cand) >= sub:
            w = cand
            break
    else:
        for cand in (64, 32, 16, 8, 4, 2):
            if rows0 % cand == 0:
                w = cand
                break
    C = w * LANE
    R = rows0 // w
    x2d = x_flat.reshape(R, C)

    # ---- Generation-aware block sizing. --------------------------------------
    # Budget ~1/2 of VMEM for the 4 double-buffered tiles (2 in + 2 out):
    # target_bytes = min(8 MiB, VMEM/8) -> 8 MiB on v5e/v6e, 8 MiB on v7x
    # (4 tiles = 32 MiB, within v7x's 64 MiB physical VMEM).
    vmem_cap = _vmem_capacity_bytes()
    target_bytes = max(2 * 1024 * 1024, min(8 * 1024 * 1024, vmem_cap // 8))
    # Explicit scoped-VMEM limit: tiles + headroom, capped at 3/4 of physical.
    vmem_limit = min(vmem_cap * 3 // 4, 4 * target_bytes + (8 << 20))

    rows_per_target = max(sub, (target_bytes // (C * itemsize)) // sub * sub)
    # Keep grid >= 4 whenever the input spans more than ~4 tiles, so the
    # software pipeline (and v7x dual-TC sharding) is never disabled.
    quarter = -(-R // 4)                 # cdiv(R, 4)
    quarter = -(-quarter // sub) * sub   # round up to a multiple of sub
    block_rows = min(rows_per_target, max(sub, quarter))
    if block_rows > R:
        block_rows = R                   # tiny input: single full block
    grid = (pl.cdiv(R, block_rows),)     # partial edge block handled by Pallas

    use_max = (0.0 < alpha <= 1.0)
    kernel = functools.partial(_leaky_relu_kernel, alpha=alpha, use_max=use_max)

    out2d = pl.pallas_call(
        kernel,
        out_shape=jax.ShapeDtypeStruct((R, C), dtype),
        grid_spec=pltpu.PrefetchScalarGridSpec(
            num_scalar_prefetch=0,
            grid=grid,
            in_specs=[pl.BlockSpec((block_rows, C), lambda i: (i, 0))],
            out_specs=pl.BlockSpec((block_rows, C), lambda i: (i, 0)),
        ),
        compiler_params=pltpu.CompilerParams(
            dimension_semantics=("parallel",),
            vmem_limit_bytes=vmem_limit,
        ),
        # Reuse the input HBM buffer only when the caller can donate it.
        input_output_aliases=({0: 0} if donate else {}),
    )(x2d)

    return out2d.reshape(orig_shape)


if __name__ == "__main__":
    key = jax.random.PRNGKey(0)
    alpha = 0.01

    # NCHW input, small shape (matches the PyTorch module's typical usage).
    x = jax.random.normal(key, (2, 4, 16, 16), dtype=jnp.float32)
    out = jax.block_until_ready(leaky_relu(x, alpha))
    ref = jnp.where(x > 0, x, alpha * x)
    assert out.shape == x.shape and out.dtype == x.dtype
    assert jnp.allclose(out, ref, atol=1e-6, rtol=1e-6)

    # Slightly larger lane-aligned shape -> wider slab / multi-row blocks.
    x1 = jax.random.normal(jax.random.PRNGKey(2), (4, 8, 32, 32), dtype=jnp.float32)
    out1 = jax.block_until_ready(leaky_relu(x1, alpha))
    ref1 = jnp.where(x1 > 0, x1, alpha * x1)
    assert jnp.allclose(out1, ref1, atol=1e-6, rtol=1e-6)

    # Non-lane-aligned shape exercises the fused-XLA fallback path.
    x2 = jax.random.normal(jax.random.PRNGKey(1), (3, 5, 7), dtype=jnp.float32)
    out2 = jax.block_until_ready(leaky_relu(x2, alpha))
    ref2 = jnp.where(x2 > 0, x2, alpha * x2)
    assert jnp.allclose(out2, ref2, atol=1e-6, rtol=1e-6)

    print("KERNEL_OK")
</pallas_src>

<mosaic_0001>
module attributes {stable_mosaic.version = 11 : i64} {
  func.func @_leaky_relu_kernel(%arg0: i32, %arg1: memref<8x256xf32, #tpu.memory_space<vmem>>, %arg2: memref<8x256xf32, #tpu.memory_space<vmem>>) attributes {dimension_semantics = [#tpu.dimension_semantics<parallel>], iteration_bounds = array<i64: 1>, scalar_prefetch = 0 : i64, scratch_operands = 0 : i64, tpu.core_type = #tpu.core_type<tc>, window_params = [{transform_indices = @transform_0, window_bounds = array<i64: 8, 256>}, {transform_indices = @transform_1, window_bounds = array<i64: 8, 256>}]} {
    %c0 = arith.constant 0 : index
    %c0_0 = arith.constant 0 : index
    %0 = vector.load %arg1[%c0, %c0_0] : memref<8x256xf32, #tpu.memory_space<vmem>>, vector<8x256xf32>
    %cst = arith.constant 0.00999999977 : f32
    %1 = vector.broadcast %cst : f32 to vector<8x256xf32>
    %2 = arith.mulf %1, %0 : vector<8x256xf32>
    %3 = arith.maximumf %0, %2 : vector<8x256xf32>
    %c0_1 = arith.constant 0 : index
    %c0_2 = arith.constant 0 : index
    %4 = vector.load %arg2[%c0_1, %c0_2] : memref<8x256xf32, #tpu.memory_space<vmem>>, vector<8x256xf32>
    tpu.vector_store %arg2[%c0_1, %c0_2], %3 {strides = array<i32>} : memref<8x256xf32, #tpu.memory_space<vmem>>, vector<8x256xf32>,
    return
  }
  func.func @transform_0(%arg0: i32) -> (i32, i32) {
    %c0_i32 = arith.constant 0 : i32
    %c0_i32_0 = arith.constant 0 : i32
    return %arg0, %c0_i32 : i32, i32
  }
  func.func @transform_1(%arg0: i32) -> (i32, i32) {
    %c0_i32 = arith.constant 0 : i32
    %c0_i32_0 = arith.constant 0 : i32
    return %arg0, %c0_i32 : i32, i32
  }
}

</mosaic_0001>

<llo_original>
// kernel: tpu_custom_call.1
$region0: #{tpu_custom_call.1}
  #allocation0 [shape = 'u32[]', space=smem, size = 0x4, offset = 0x4, fixed_abs, tag = 'smem constant byte address 0x4 - core index']
  #allocation1 [shape = 'u32[144,128]{1,0:T(1,128)}', space=vmem, size = 0x12000, scoped, tag = 'internal scratch']
  %s0 = inlined_call_operand.hbm [shape: f32[8,256], index: 0, kind: input, shape index: {}]
  %s1 = inlined_call_operand.hbm [shape: f32[8,256], index: 1, kind: output, shape index: {}]
  %s2 = sld [smem:[#allocation0]]
  $region18: #{tpu_custom_call.1} parent=0
    _
  %s4 = ssub.s32 1, %s2
  %s5 = scalar_select 0, %s4, %s2
  $region1: #{tpu_custom_call.1} parent=0
    #allocation2 [shape = 'u8[8192]{0}', space=vmem, size = 0x2000, scoped, tag = 'input window, operand 0, single buffered']
    #allocation3 [shape = 's32[1]{0}', space=sflag, size = 0x4, scoped, tag = 'scoped memory for tpu_custom_call.1']
    #allocation4 [shape = 's32[1]{0}', space=sflag, size = 0x4, scoped, tag = 'scoped memory for tpu_custom_call.1']
    #allocation5 [shape = 'u8[8192]{0}', space=vmem, size = 0x2000, scoped, tag = 'output window, operand 0, single buffered']
    %6 = vsyncpa [#allocation3], 0
    %7 = vsyncpa [#allocation4], 0
    // Predicated region
    $region2: #{tpu_custom_call.1} parent=1 // pred_check
      _
    $region3: #{tpu_custom_call.1} parent=1 // pred_check_branch
      %9 = sbr.rel (0) target = $region5
    $region4: #{tpu_custom_call.1} parent=1 // pred_region
      %s11 = ssub.s32 256, 256
      %12 = vsyncadd [#allocation3], %s11
      %s14 = sshll.u32 [#allocation2], 4
      %s15 = int_to_ptr.vmem [resolvable:$true] %s14
      %17 = dma.hbm_to_vmem [thread:$0]  %s0, 256, %s15, [#allocation3]
    $region5: #{tpu_custom_call.1} parent=1 // pred_fallthru
      _
    // Predicated region
    $region6: #{tpu_custom_call.1} parent=1 // pred_check
      _
    $region7: #{tpu_custom_call.1} parent=1 // pred_check_branch
      %19 = sbr.rel (0) target = $region9
    $region8: #{tpu_custom_call.1} parent=1 // pred_region
      %20 = dma.done [#allocation3], 256
    $region9: #{tpu_custom_call.1} parent=1 // pred_fallthru
      _
    %v21 = vld [vmem:[#allocation2] sm:$0xff]
    %v22 = vld [vmem:[#allocation2 + $0x8] sm:$0xff]
    %v23 = vmul.f32 %v21, 0.01
    %v24 = vmul.f32 %v22, 0.01
    %v25 = vmax.f32 %v21, %v23
    %v26 = vmax.f32 %v22, %v24
    %27 = vst [vmem:[#allocation5] sm:$0xff] %v25
    %28 = vst [vmem:[#allocation5 + $0x8] sm:$0xff] %v26
    // Predicated region
    $region10: #{tpu_custom_call.1} parent=1 // pred_check
      _
    $region11: #{tpu_custom_call.1} parent=1 // pred_check_branch
      %30 = sbr.rel (0) target = $region13
    $region12: #{tpu_custom_call.1} parent=1 // pred_region
      %s32 = ssub.s32 256, 256
      %33 = vsyncadd [#allocation4], %s32
      %s35 = sshll.u32 [#allocation5], 4
      %s36 = int_to_ptr.vmem [resolvable:$true] %s35
      %38 = dma.vmem_to_hbm [thread:$0]  %s36, 256, %s1, [#allocation4]
    $region13: #{tpu_custom_call.1} parent=1 // pred_fallthru
      _
    // Predicated region
    $region14: #{tpu_custom_call.1} parent=1 // pred_check
      _
    $region15: #{tpu_custom_call.1} parent=1 // pred_check_branch
      %40 = sbr.rel (0) target = $region17
    $region16: #{tpu_custom_call.1} parent=1 // pred_region
      %41 = dma.done [#allocation4], 256
    $region17: #{tpu_custom_call.1} parent=1 // pred_fallthru
      _
    %42 = vsyncpa [#allocation3], 1
    %43 = vsyncpa [#allocation4], 1

</llo_original>
